<compile_context>
chip_gen: v5e
topology: v5e:2x2
jax: 0.10.0
libtpu: 0.0.40
codegen_flags: <defaults>
</compile_context>

<pallas_src>
import jax
import jax.numpy as jnp
from jax.experimental import pallas as pl
from jax.experimental.pallas import tpu as pltpu

HIDDEN = 20  # fixed by the module (out_channels=20 for the 3 inner convs)


def _round_up(x, m):
    return ((x + m - 1) // m) * m


def _noise_resnet_kernel(noise_ref,
                         w1_ref, b1_ref, w2_ref, b2_ref,
                         w3_ref, b3_ref, w4_ref, b4_ref,
                         out_ref):
    # Block is (ch, tile_p): channels on sublanes, pixels on lanes (lane-dense).
    x = noise_ref[...].astype(jnp.float32)          # fresh noise == residual
    h = jnp.dot(w1_ref[...], x, preferred_element_type=jnp.float32) + b1_ref[...]
    h = jnp.maximum(h, 0.0)
    h = jnp.dot(w2_ref[...], h, preferred_element_type=jnp.float32) + b2_ref[...]
    h = jnp.maximum(h, 0.0)
    h = jnp.dot(w3_ref[...], h, preferred_element_type=jnp.float32) + b3_ref[...]
    h = jnp.maximum(h, 0.0)
    y = jnp.dot(w4_ref[...], h, preferred_element_type=jnp.float32) + b4_ref[...] + x
    out_ref[...] = y.astype(out_ref.dtype)


def init_params(channels, key):
    """Matches custom_init=True: weights ~ N(0, 0.01), biases zero.

    Conv2d weights (out, in, 1, 1) are stored as (out, in); biases are stored
    as (out, 1) so they broadcast along the lane (pixel) axis in the kernel.
    """
    ks = jax.random.split(key, 4)
    std = 0.01
    w1 = std * jax.random.normal(ks[0], (HIDDEN, channels), jnp.float32)
    w2 = std * jax.random.normal(ks[1], (HIDDEN, HIDDEN), jnp.float32)
    w3 = std * jax.random.normal(ks[2], (HIDDEN, HIDDEN), jnp.float32)
    w4 = std * jax.random.normal(ks[3], (channels, HIDDEN), jnp.float32)
    b1 = jnp.zeros((HIDDEN, 1), jnp.float32)
    b2 = jnp.zeros((HIDDEN, 1), jnp.float32)
    b3 = jnp.zeros((HIDDEN, 1), jnp.float32)
    b4 = jnp.zeros((channels, 1), jnp.float32)
    return (w1, b1, w2, b2, w3, b3, w4, b4)


def _pick_tile(S, ch, bs, tile_p_cap):
    """Channel-aware, VMEM-budgeted, balanced pixel-tile choice.

    Per-grid-step VMEM footprint (f32 words/column):
      2*ch (double-buffered noise in) + 2*ch (double-buffered out)
      + ch (residual copy) + 3*round_up(HIDDEN,8) (hidden intermediates).
    Budget kept well inside the 32 MiB default scoped VMEM (safe on v7x).
    """
    ch_pad = max(_round_up(ch, 8), 8)
    hid_pad = _round_up(HIDDEN, 8)
    bytes_per_col = (5 * ch_pad + 3 * hid_pad) * 4
    budget = 8 * 1024 * 1024
    tp_vmem = max(256, (budget // bytes_per_col) // 256 * 256)
    tp_cap = max(256, min(int(tile_p_cap), tp_vmem))

    n = max(1, pl.cdiv(S, tp_cap))
    # Give both v7x TensorCores something to do when the grid would collapse
    # to a single cell (no effect on v5e/v6e which have 1 TC).
    if bs * n < 2:
        n = 2
    tp = _round_up(pl.cdiv(S, n), 256)
    if tp >= S:
        # Single full-extent block along the pixel axis (always a legal shape).
        return S, 1
    return tp, pl.cdiv(S, tp)


def noise_resnet_1x1conv(x, params, key, *, tile_p=4096):
    """Forward pass. x: (bs, ch, nx, ny) NCHW (values ignored, like PyTorch).

    `key` drives the fresh standard-normal noise drawn on every call.
    """
    bs, ch, nx, ny = x.shape
    dtype = x.dtype
    S = nx * ny

    w1, b1, w2, b2, w3, b3, w4, b4 = params
    noise = jax.random.normal(key, (bs, ch, S), dtype=dtype)

    tp, n_tiles = _pick_tile(S, ch, bs, tile_p)

    full = lambda b, t: (0, 0)  # weights/biases: one resident block

    out = pl.pallas_call(
        _noise_resnet_kernel,
        out_shape=jax.ShapeDtypeStruct((bs, ch, S), dtype),
        grid=(bs, n_tiles),
        in_specs=[
            pl.BlockSpec((None, ch, tp), lambda b, t: (b, 0, t)),  # noise
            pl.BlockSpec((HIDDEN, ch), full),      # w1
            pl.BlockSpec((HIDDEN, 1), full),       # b1
            pl.BlockSpec((HIDDEN, HIDDEN), full),  # w2
            pl.BlockSpec((HIDDEN, 1), full),       # b2
            pl.BlockSpec((HIDDEN, HIDDEN), full),  # w3
            pl.BlockSpec((HIDDEN, 1), full),       # b3
            pl.BlockSpec((ch, HIDDEN), full),      # w4
            pl.BlockSpec((ch, 1), full),           # b4
        ],
        out_specs=pl.BlockSpec((None, ch, tp), lambda b, t: (b, 0, t)),
        compiler_params=pltpu.CompilerParams(
            dimension_semantics=("parallel", "parallel")),
    )(noise, w1, b1, w2, b2, w3, b3, w4, b4)

    # (bs, ch, S) -> (bs, ch, nx, ny) is a free, contiguous reshape.
    return out.reshape(bs, ch, nx, ny)


def _reference(params, noise_bcs):
    """Pure-JAX forward given explicit noise of shape (bs, ch, S)."""
    w1, b1, w2, b2, w3, b3, w4, b4 = params
    x = noise_bcs.astype(jnp.float32)
    hi = jax.lax.Precision.HIGHEST
    h = jnp.maximum(jnp.einsum("oi,bis->bos", w1, x, precision=hi) + b1[None], 0.0)
    h = jnp.maximum(jnp.einsum("oi,bis->bos", w2, h, precision=hi) + b2[None], 0.0)
    h = jnp.maximum(jnp.einsum("oi,bis->bos", w3, h, precision=hi) + b3[None], 0.0)
    y = jnp.einsum("oi,bis->bos", w4, h, precision=hi) + b4[None] + x
    return y


if __name__ == "__main__":
    key = jax.random.PRNGKey(0)
    k_param, k_input, k_noise = jax.random.split(key, 3)

    bs, ch, nx, ny = 2, 4, 16, 16
    x = jax.random.normal(k_input, (bs, ch, nx, ny), jnp.float32)
    params = init_params(ch, k_param)

    out = noise_resnet_1x1conv(x, params, k_noise)
    out = jax.block_until_ready(out)
    assert out.shape == (bs, ch, nx, ny)
    assert out.dtype == x.dtype

    # (1) Statistical check: with N(0, 0.01) weights the output is dominated
    #     by the fresh standard-normal residual noise.
    mean = float(jnp.mean(out))
    std = float(jnp.std(out))
    assert abs(mean) < 0.1, f"mean={mean}"
    assert 0.85 < std < 1.15, f"std={std}"

    # (2) Exact numerical check: rebuild the same noise from the same key and
    #     run a pure-JAX reference of the conv chain + residual.
    noise = jax.random.normal(k_noise, (bs, ch, nx * ny), jnp.float32)
    ref = _reference(params, noise).reshape(bs, ch, nx, ny)
    max_err = float(jnp.max(jnp.abs(out - ref)))
    assert max_err < 1e-4, f"max_err={max_err}"

    print("KERNEL_OK")
</pallas_src>

<mosaic_0001>
module attributes {stable_mosaic.version = 11 : i64} {
  func.func @_noise_resnet_kernel(%arg0: i32, %arg1: i32, %arg2: memref<1x4x256xf32, #tpu.memory_space<vmem>>, %arg3: memref<20x4xf32, #tpu.memory_space<vmem>>, %arg4: memref<20x1xf32, #tpu.memory_space<vmem>>, %arg5: memref<20x20xf32, #tpu.memory_space<vmem>>, %arg6: memref<20x1xf32, #tpu.memory_space<vmem>>, %arg7: memref<20x20xf32, #tpu.memory_space<vmem>>, %arg8: memref<20x1xf32, #tpu.memory_space<vmem>>, %arg9: memref<4x20xf32, #tpu.memory_space<vmem>>, %arg10: memref<4x1xf32, #tpu.memory_space<vmem>>, %arg11: memref<1x4x256xf32, #tpu.memory_space<vmem>>) attributes {dimension_semantics = [#tpu.dimension_semantics<parallel>, #tpu.dimension_semantics<parallel>], iteration_bounds = array<i64: 2, 1>, scalar_prefetch = 0 : i64, scratch_operands = 0 : i64, tpu.core_type = #tpu.core_type<tc>, window_params = [{transform_indices = @transform_0, window_bounds = array<i64: 1, 4, 256>}, {pipeline_mode = #tpu.pipeline_mode<synchronous>, transform_indices = @transform_1, window_bounds = array<i64: 20, 4>}, {pipeline_mode = #tpu.pipeline_mode<synchronous>, transform_indices = @transform_2, window_bounds = array<i64: 20, 1>}, {pipeline_mode = #tpu.pipeline_mode<synchronous>, transform_indices = @transform_3, window_bounds = array<i64: 20, 20>}, {pipeline_mode = #tpu.pipeline_mode<synchronous>, transform_indices = @transform_4, window_bounds = array<i64: 20, 1>}, {pipeline_mode = #tpu.pipeline_mode<synchronous>, transform_indices = @transform_5, window_bounds = array<i64: 20, 20>}, {pipeline_mode = #tpu.pipeline_mode<synchronous>, transform_indices = @transform_6, window_bounds = array<i64: 20, 1>}, {pipeline_mode = #tpu.pipeline_mode<synchronous>, transform_indices = @transform_7, window_bounds = array<i64: 4, 20>}, {pipeline_mode = #tpu.pipeline_mode<synchronous>, transform_indices = @transform_8, window_bounds = array<i64: 4, 1>}, {transform_indices = @transform_9, window_bounds = array<i64: 1, 4, 256>}]} {
    %c0 = arith.constant 0 : index
    %c0_0 = arith.constant 0 : index
    %c0_1 = arith.constant 0 : index
    %0 = vector.load %arg2[%c0, %c0_0, %c0_1] : memref<1x4x256xf32, #tpu.memory_space<vmem>>, vector<1x4x256xf32>
    %1 = vector.shape_cast %0 : vector<1x4x256xf32> to vector<4x256xf32>
    %c0_2 = arith.constant 0 : index
    %c0_3 = arith.constant 0 : index
    %2 = vector.load %arg3[%c0_2, %c0_3] : memref<20x4xf32, #tpu.memory_space<vmem>>, vector<20x4xf32>
    %cst = arith.constant dense<0.000000e+00> : vector<20x256xf32>
    %3 = tpu.matmul %2, %1, %cst {dimension_numbers = #tpu.dot_dimension_numbers<[1], [0], [0], [1], [0, 0, 1, 1], [], []>} : vector<20x4xf32>, vector<4x256xf32>, vector<20x256xf32> -> vector<20x256xf32>
    %c0_4 = arith.constant 0 : index
    %c0_5 = arith.constant 0 : index
    %4 = vector.load %arg4[%c0_4, %c0_5] : memref<20x1xf32, #tpu.memory_space<vmem>>, vector<20x1xf32>
    %5 = vector.broadcast %4 : vector<20x1xf32> to vector<20x256xf32>
    %6 = arith.addf %3, %5 : vector<20x256xf32>
    %cst_6 = arith.constant 0.000000e+00 : f32
    %7 = vector.broadcast %cst_6 : f32 to vector<20x256xf32>
    %8 = arith.maximumf %6, %7 : vector<20x256xf32>
    %c0_7 = arith.constant 0 : index
    %c0_8 = arith.constant 0 : index
    %9 = vector.load %arg5[%c0_7, %c0_8] : memref<20x20xf32, #tpu.memory_space<vmem>>, vector<20x20xf32>
    %cst_9 = arith.constant dense<0.000000e+00> : vector<20x256xf32>
    %10 = tpu.matmul %9, %8, %cst_9 {dimension_numbers = #tpu.dot_dimension_numbers<[1], [0], [0], [1], [0, 0, 1, 1], [], []>} : vector<20x20xf32>, vector<20x256xf32>, vector<20x256xf32> -> vector<20x256xf32>
    %c0_10 = arith.constant 0 : index
    %c0_11 = arith.constant 0 : index
    %11 = vector.load %arg6[%c0_10, %c0_11] : memref<20x1xf32, #tpu.memory_space<vmem>>, vector<20x1xf32>
    %12 = vector.broadcast %11 : vector<20x1xf32> to vector<20x256xf32>
    %13 = arith.addf %10, %12 : vector<20x256xf32>
    %cst_12 = arith.constant 0.000000e+00 : f32
    %14 = vector.broadcast %cst_12 : f32 to vector<20x256xf32>
    %15 = arith.maximumf %13, %14 : vector<20x256xf32>
    %c0_13 = arith.constant 0 : index
    %c0_14 = arith.constant 0 : index
    %16 = vector.load %arg7[%c0_13, %c0_14] : memref<20x20xf32, #tpu.memory_space<vmem>>, vector<20x20xf32>
    %cst_15 = arith.constant dense<0.000000e+00> : vector<20x256xf32>
    %17 = tpu.matmul %16, %15, %cst_15 {dimension_numbers = #tpu.dot_dimension_numbers<[1], [0], [0], [1], [0, 0, 1, 1], [], []>} : vector<20x20xf32>, vector<20x256xf32>, vector<20x256xf32> -> vector<20x256xf32>
    %c0_16 = arith.constant 0 : index
    %c0_17 = arith.constant 0 : index
    %18 = vector.load %arg8[%c0_16, %c0_17] : memref<20x1xf32, #tpu.memory_space<vmem>>, vector<20x1xf32>
    %19 = vector.broadcast %18 : vector<20x1xf32> to vector<20x256xf32>
    %20 = arith.addf %17, %19 : vector<20x256xf32>
    %cst_18 = arith.constant 0.000000e+00 : f32
    %21 = vector.broadcast %cst_18 : f32 to vector<20x256xf32>
    %22 = arith.maximumf %20, %21 : vector<20x256xf32>
    %c0_19 = arith.constant 0 : index
    %c0_20 = arith.constant 0 : index
    %23 = vector.load %arg9[%c0_19, %c0_20] : memref<4x20xf32, #tpu.memory_space<vmem>>, vector<4x20xf32>
    %cst_21 = arith.constant dense<0.000000e+00> : vector<4x256xf32>
    %24 = tpu.matmul %23, %22, %cst_21 {dimension_numbers = #tpu.dot_dimension_numbers<[1], [0], [0], [1], [0, 0, 1, 1], [], []>} : vector<4x20xf32>, vector<20x256xf32>, vector<4x256xf32> -> vector<4x256xf32>
    %c0_22 = arith.constant 0 : index
    %c0_23 = arith.constant 0 : index
    %25 = vector.load %arg10[%c0_22, %c0_23] : memref<4x1xf32, #tpu.memory_space<vmem>>, vector<4x1xf32>
    %26 = vector.broadcast %25 : vector<4x1xf32> to vector<4x256xf32>
    %27 = arith.addf %24, %26 : vector<4x256xf32>
    %28 = arith.addf %27, %1 : vector<4x256xf32>
    %c0_24 = arith.constant 0 : index
    %c0_25 = arith.constant 0 : index
    %c0_26 = arith.constant 0 : index
    %29 = vector.load %arg11[%c0_24, %c0_25, %c0_26] : memref<1x4x256xf32, #tpu.memory_space<vmem>>, vector<1x4x256xf32>
    %30 = vector.shape_cast %29 : vector<1x4x256xf32> to vector<4x256xf32>
    %31 = vector.shape_cast %28 : vector<4x256xf32> to vector<1x4x256xf32>
    tpu.vector_store %arg11[%c0_24, %c0_25, %c0_26], %31 {strides = array<i32>} : memref<1x4x256xf32, #tpu.memory_space<vmem>>, vector<1x4x256xf32>,
    return
  }
  func.func @transform_0(%arg0: i32, %arg1: i32) -> (i32, i32, i32) {
    %c0_i32 = arith.constant 0 : i32
    %c0_i32_0 = arith.constant 0 : i32
    return %arg0, %c0_i32, %arg1 : i32, i32, i32
  }
  func.func @transform_1(%arg0: i32, %arg1: i32) -> (i32, i32) {
    %c0_i32 = arith.constant 0 : i32
    %c0_i32_0 = arith.constant 0 : i32
    %c0_i32_1 = arith.constant 0 : i32
    return %c0_i32, %c0_i32_0 : i32, i32
  }
  func.func @transform_2(%arg0: i32, %arg1: i32) -> (i32, i32) {
    %c0_i32 = arith.constant 0 : i32
    %c0_i32_0 = arith.constant 0 : i32
    %c0_i32_1 = arith.constant 0 : i32
    return %c0_i32, %c0_i32_0 : i32, i32
  }
  func.func @transform_3(%arg0: i32, %arg1: i32) -> (i32, i32) {
    %c0_i32 = arith.constant 0 : i32
    %c0_i32_0 = arith.constant 0 : i32
    %c0_i32_1 = arith.constant 0 : i32
    return %c0_i32, %c0_i32_0 : i32, i32
  }
  func.func @transform_4(%arg0: i32, %arg1: i32) -> (i32, i32) {
    %c0_i32 = arith.constant 0 : i32
    %c0_i32_0 = arith.constant 0 : i32
    %c0_i32_1 = arith.constant 0 : i32
    return %c0_i32, %c0_i32_0 : i32, i32
  }
  func.func @transform_5(%arg0: i32, %arg1: i32) -> (i32, i32) {
    %c0_i32 = arith.constant 0 : i32
    %c0_i32_0 = arith.constant 0 : i32
    %c0_i32_1 = arith.constant 0 : i32
    return %c0_i32, %c0_i32_0 : i32, i32
  }
  func.func @transform_6(%arg0: i32, %arg1: i32) -> (i32, i32) {
    %c0_i32 = arith.constant 0 : i32
    %c0_i32_0 = arith.constant 0 : i32
    %c0_i32_1 = arith.constant 0 : i32
    return %c0_i32, %c0_i32_0 : i32, i32
  }
  func.func @transform_7(%arg0: i32, %arg1: i32) -> (i32, i32) {
    %c0_i32 = arith.constant 0 : i32
    %c0_i32_0 = arith.constant 0 : i32
    %c0_i32_1 = arith.constant 0 : i32
    return %c0_i32, %c0_i32_0 : i32, i32
  }
  func.func @transform_8(%arg0: i32, %arg1: i32) -> (i32, i32) {
    %c0_i32 = arith.constant 0 : i32
    %c0_i32_0 = arith.constant 0 : i32
    %c0_i32_1 = arith.constant 0 : i32
    return %c0_i32, %c0_i32_0 : i32, i32
  }
  func.func @transform_9(%arg0: i32, %arg1: i32) -> (i32, i32, i32) {
    %c0_i32 = arith.constant 0 : i32
    %c0_i32_0 = arith.constant 0 : i32
    return %arg0, %c0_i32, %arg1 : i32, i32, i32
  }
}

</mosaic_0001>

<llo_original>
// kernel: tpu_custom_call.1
$region0: #{tpu_custom_call.1}
  #allocation0 [shape = 'u32[]', space=smem, size = 0x4, offset = 0x4, fixed_abs, tag = 'smem constant byte address 0x4 - core index']
  #allocation1 [shape = 'u32[72,128]{1,0:T(1,128)}', space=vmem, size = 0x9000, scoped, tag = 'internal scratch']
  %s0 = inlined_call_operand.vmem [shape: f32[2,4,256], index: 0, kind: input, shape index: {}]
  %s1 = inlined_call_operand.vmem [shape: f32[20,4], index: 1, kind: input, shape index: {}]
  %s2 = inlined_call_operand.vmem [shape: f32[20,1], index: 2, kind: input, shape index: {}]
  %s3 = inlined_call_operand.vmem [shape: f32[20,20], index: 3, kind: input, shape index: {}]
  %s4 = inlined_call_operand.vmem [shape: f32[20,1], index: 4, kind: input, shape index: {}]
  %s5 = inlined_call_operand.vmem [shape: f32[20,20], index: 5, kind: input, shape index: {}]
  %s6 = inlined_call_operand.vmem [shape: f32[20,1], index: 6, kind: input, shape index: {}]
  %s7 = inlined_call_operand.vmem [shape: f32[4,20], index: 7, kind: input, shape index: {}]
  %s8 = inlined_call_operand.vmem [shape: f32[4,1], index: 8, kind: input, shape index: {}]
  %s9 = inlined_call_operand.hbm [shape: f32[2,4,256], index: 9, kind: output, shape index: {}]
  %s10 = sld [smem:[#allocation0]]
  $region69: #{tpu_custom_call.1} parent=0
    _
  %s12 = ssub.s32 1, %s10
  %s13 = scalar_select 0, %s12, %s10
  $region1: #{tpu_custom_call.1} parent=0
    #allocation2 [shape = 'u8[8192]{0}', space=vmem, size = 0x2000, scoped, tag = 'output window, operand 0']
    #allocation3 [shape = 's32[2]{0}', space=sflag, size = 0x8, scoped, tag = 'scoped memory for tpu_custom_call.1']
    %14 = vsyncpa [#allocation3], 0
    %s15 = scalar_lea.sflag [#allocation3], 1
    %16 = vsyncpa %s15, 0
    loop: start=0, step=1, limit=4
    $region2: #{tpu_custom_call.1} parent=1 // loop_pre_header
      _
    $region3: #{tpu_custom_call.1} parent=1 // loop_header
      %s18 = sphi 0, %s22
      %p19 = scmp.ge.s32.totalorder %s18, 4
      %s25 = sphi 0, %s37
      %s26 = sphi 0, %s33
      %s27 = sphi 0, %s25
      %s28 = sphi 0, %s26
      %s29 = sphi 0, %s27
      %s30 = sphi 0, %s28
      %s42 = sphi 0, %s44
      %s45 = sphi 0, %s42
      %s46 = sphi 0, %s45
      %s62 = sphi 0, %s46
      %s66 = sphi 0, %s66
      %s68 = sphi 0, %s66
      %s69 = sphi 0, %s68
      %s83 = sphi 0, %s69
      %s87 = sphi 0, %s87
      %s89 = sphi 0, %s87
      %s90 = sphi 0, %s89
      %s104 = sphi 0, %s90
      %s108 = sphi 0, %s108
      %s110 = sphi 0, %s108
      %s111 = sphi 0, %s110
      %s125 = sphi 0, %s111
      %s129 = sphi 0, %s129
      %s131 = sphi 0, %s129
      %s132 = sphi 0, %s131
      %s146 = sphi 0, %s132
      %s150 = sphi 0, %s150
      %s152 = sphi 0, %s150
      %s153 = sphi 0, %s152
      %s167 = sphi 0, %s153
      %s171 = sphi 0, %s171
      %s173 = sphi 0, %s171
      %s174 = sphi 0, %s173
      %s188 = sphi 0, %s174
      %s192 = sphi 0, %s192
      %s194 = sphi 0, %s192
      %s195 = sphi 0, %s194
      %s209 = sphi 0, %s195
      %s213 = sphi 0, %s213
      %s215 = sphi 0, %s213
      %s216 = sphi 0, %s215
      %s230 = sphi 0, %s216
      %s238 = sphi 0, %s240
      %s241 = sphi 0, %s238
      %s242 = sphi 0, %s241
      %s258 = sphi 0, %s242
    $region4: #{tpu_custom_call.1} parent=1 // loop_header_branch
      %21 = sbr.rel (%p19) target = $region8
    $region5: #{tpu_custom_call.1} parent=1 // loop_body
      %s23 = ssub.s32 %s18, 1
      %s24 = ssub.s32 %s18, 2
      %s31 = sadd.s32 1, %s26
      %p32 = scmp.ge.s32.totalorder %s31, 1
      %s33 = scalar_select %p32, 0, %s31
      %s34 = sadd.s32 1, %s25
      %s35 = scalar_select %p32, %s34, %s25
      %p36 = scmp.ge.s32.totalorder %s35, 2
      %s37 = scalar_select %p36, 0, %s35
      %s38 = ssub.s32 %s25, %s37
      %s39 = ssub.s32 %s26, %s33
      %s40 = sor.u32 %s38, %s39
      %p41 = scmp.eq.s32.totalorder %s40, 0
      %s43 = sadd.s32 %s42, 1
      %s44 = scalar_select %p41, %s42, %s43
      %p47 = pneg %p41
      %p48 = scmp.eq.s32.totalorder %s18, 1
      %p49 = por %p47, %p48
      %p50 = scmp.ne.s32.totalorder %s42, %s45
      %p51 = scmp.eq.s32.totalorder %s18, 0
      %p52 = por %p50, %p51
      %p53 = scmp.ne.s32.totalorder %s42, %s45
      %p54 = scmp.eq.s32.totalorder %s23, 1
      %p55 = por %p53, %p54
      %p56 = scmp.ne.s32.totalorder %s45, %s46
      %p57 = scmp.eq.s32.totalorder %s23, 0
      %p58 = por %p56, %p57
      %p59 = scmp.ne.s32.totalorder %s45, %s46
      %p60 = scmp.eq.s32.totalorder %s24, 1
      %p61 = por %p59, %p60
      %p63 = scmp.ne.s32.totalorder %s46, %s62
      %p64 = scmp.eq.s32.totalorder %s24, 0
      %p65 = por %p63, %p64
      %s67 = sadd.s32 %s66, 1
      %p70 = scmp.eq.s32.totalorder %s18, 1
      %p71 = scmp.ne.s32.totalorder %s66, %s68
      %p72 = scmp.eq.s32.totalorder %s18, 0
      %p73 = por %p71, %p72
      %p74 = scmp.ne.s32.totalorder %s66, %s68
      %p75 = scmp.eq.s32.totalorder %s23, 1
      %p76 = por %p74, %p75
      %p77 = scmp.ne.s32.totalorder %s68, %s69
      %p78 = scmp.eq.s32.totalorder %s23, 0
      %p79 = por %p77, %p78
      %p80 = scmp.ne.s32.totalorder %s68, %s69
      %p81 = scmp.eq.s32.totalorder %s24, 1
      %p82 = por %p80, %p81
      %p84 = scmp.ne.s32.totalorder %s69, %s83
      %p85 = scmp.eq.s32.totalorder %s24, 0
      %p86 = por %p84, %p85
      %s88 = sadd.s32 %s87, 1
      %p91 = scmp.eq.s32.totalorder %s18, 1
      %p92 = scmp.ne.s32.totalorder %s87, %s89
      %p93 = scmp.eq.s32.totalorder %s18, 0
      %p94 = por %p92, %p93
      %p95 = scmp.ne.s32.totalorder %s87, %s89
      %p96 = scmp.eq.s32.totalorder %s23, 1
      %p97 = por %p95, %p96
      %p98 = scmp.ne.s32.totalorder %s89, %s90
      %p99 = scmp.eq.s32.totalorder %s23, 0
      %p100 = por %p98, %p99
      %p101 = scmp.ne.s32.totalorder %s89, %s90
      %p102 = scmp.eq.s32.totalorder %s24, 1
      %p103 = por %p101, %p102
      %p105 = scmp.ne.s32.totalorder %s90, %s104
      %p106 = scmp.eq.s32.totalorder %s24, 0
      %p107 = por %p105, %p106
      %s109 = sadd.s32 %s108, 1
      %p112 = scmp.eq.s32.totalorder %s18, 1
      %p113 = scmp.ne.s32.totalorder %s108, %s110
      %p114 = scmp.eq.s32.totalorder %s18, 0
      %p115 = por %p113, %p114
      %p116 = scmp.ne.s32.totalorder %s108, %s110
      %p117 = scmp.eq.s32.totalorder %s23, 1
      %p118 = por %p116, %p117
      %p119 = scmp.ne.s32.totalorder %s110, %s111
      %p120 = scmp.eq.s32.totalorder %s23, 0
      %p121 = por %p119, %p120
      %p122 = scmp.ne.s32.totalorder %s110, %s111
      %p123 = scmp.eq.s32.totalorder %s24, 1
      %p124 = por %p122, %p123
      %p126 = scmp.ne.s32.totalorder %s111, %s125
      %p127 = scmp.eq.s32.totalorder %s24, 0
      %p128 = por %p126, %p127
      %s130 = sadd.s32 %s129, 1
      %p133 = scmp.eq.s32.totalorder %s18, 1
      %p134 = scmp.ne.s32.totalorder %s129, %s131
      %p135 = scmp.eq.s32.totalorder %s18, 0
      %p136 = por %p134, %p135
      %p137 = scmp.ne.s32.totalorder %s129, %s131
      %p138 = scmp.eq.s32.totalorder %s23, 1
      %p139 = por %p137, %p138
      %p140 = scmp.ne.s32.totalorder %s131, %s132
      %p141 = scmp.eq.s32.totalorder %s23, 0
      %p142 = por %p140, %p141
      %p143 = scmp.ne.s32.totalorder %s131, %s132
      %p144 = scmp.eq.s32.totalorder %s24, 1
      %p145 = por %p143, %p144
      %p147 = scmp.ne.s32.totalorder %s132, %s146
      %p148 = scmp.eq.s32.totalorder %s24, 0
      %p149 = por %p147, %p148
      %s151 = sadd.s32 %s150, 1
      %p154 = scmp.eq.s32.totalorder %s18, 1
      %p155 = scmp.ne.s32.totalorder %s150, %s152
      %p156 = scmp.eq.s32.totalorder %s18, 0
      %p157 = por %p155, %p156
      %p158 = scmp.ne.s32.totalorder %s150, %s152
      %p159 = scmp.eq.s32.totalorder %s23, 1
      %p160 = por %p158, %p159
      %p161 = scmp.ne.s32.totalorder %s152, %s153
      %p162 = scmp.eq.s32.totalorder %s23, 0
      %p163 = por %p161, %p162
      %p164 = scmp.ne.s32.totalorder %s152, %s153
      %p165 = scmp.eq.s32.totalorder %s24, 1
      %p166 = por %p164, %p165
      %p168 = scmp.ne.s32.totalorder %s153, %s167
      %p169 = scmp.eq.s32.totalorder %s24, 0
      %p170 = por %p168, %p169
      %s172 = sadd.s32 %s171, 1
      %p175 = scmp.eq.s32.totalorder %s18, 1
      %p176 = scmp.ne.s32.totalorder %s171, %s173
      %p177 = scmp.eq.s32.totalorder %s18, 0
      %p178 = por %p176, %p177
      %p179 = scmp.ne.s32.totalorder %s171, %s173
      %p180 = scmp.eq.s32.totalorder %s23, 1
      %p181 = por %p179, %p180
      %p182 = scmp.ne.s32.totalorder %s173, %s174
      %p183 = scmp.eq.s32.totalorder %s23, 0
      %p184 = por %p182, %p183
      %p185 = scmp.ne.s32.totalorder %s173, %s174
      %p186 = scmp.eq.s32.totalorder %s24, 1
      %p187 = por %p185, %p186
      %p189 = scmp.ne.s32.totalorder %s174, %s188
      %p190 = scmp.eq.s32.totalorder %s24, 0
      %p191 = por %p189, %p190
      %s193 = sadd.s32 %s192, 1
      %p196 = scmp.eq.s32.totalorder %s18, 1
      %p197 = scmp.ne.s32.totalorder %s192, %s194
      %p198 = scmp.eq.s32.totalorder %s18, 0
      %p199 = por %p197, %p198
      %p200 = scmp.ne.s32.totalorder %s192, %s194
      %p201 = scmp.eq.s32.totalorder %s23, 1
      %p202 = por %p200, %p201
      %p203 = scmp.ne.s32.totalorder %s194, %s195
      %p204 = scmp.eq.s32.totalorder %s23, 0
      %p205 = por %p203, %p204
      %p206 = scmp.ne.s32.totalorder %s194, %s195
      %p207 = scmp.eq.s32.totalorder %s24, 1
      %p208 = por %p206, %p207
      %p210 = scmp.ne.s32.totalorder %s195, %s209
      %p211 = scmp.eq.s32.totalorder %s24, 0
      %p212 = por %p210, %p211
      %s214 = sadd.s32 %s213, 1
      %p217 = scmp.eq.s32.totalorder %s18, 1
      %p218 = scmp.ne.s32.totalorder %s213, %s215
      %p219 = scmp.eq.s32.totalorder %s18, 0
      %p220 = por %p218, %p219
      %p221 = scmp.ne.s32.totalorder %s213, %s215
      %p222 = scmp.eq.s32.totalorder %s23, 1
      %p223 = por %p221, %p222
      %p224 = scmp.ne.s32.totalorder %s215, %s216
      %p225 = scmp.eq.s32.totalorder %s23, 0
      %p226 = por %p224, %p225
      %p227 = scmp.ne.s32.totalorder %s215, %s216
      %p228 = scmp.eq.s32.totalorder %s24, 1
      %p229 = por %p227, %p228
      %p231 = scmp.ne.s32.totalorder %s216, %s230
      %p232 = scmp.eq.s32.totalorder %s24, 0
      %p233 = por %p231, %p232
      %s234 = ssub.s32 %s25, %s37
      %s235 = ssub.s32 %s26, %s33
      %s236 = sor.u32 %s234, %s235
      %p237 = scmp.eq.s32.totalorder %s236, 0
      %s239 = sadd.s32 %s238, 1
      %s240 = scalar_select %p237, %s238, %s239
      %p243 = pneg %p237
      %p244 = scmp.eq.s32.totalorder %s18, 1
      %p245 = por %p243, %p244
      %p246 = scmp.ne.s32.totalorder %s238, %s241
      %p247 = scmp.eq.s32.totalorder %s18, 0
      %p248 = por %p246, %p247
      %p249 = scmp.ne.s32.totalorder %s238, %s241
      %p250 = scmp.eq.s32.totalorder %s23, 1
      %p251 = por %p249, %p250
      %p252 = scmp.ne.s32.totalorder %s241, %s242
      %p253 = scmp.eq.s32.totalorder %s23, 0
      %p254 = por %p252, %p253
      %p255 = scmp.ne.s32.totalorder %s241, %s242
      %p256 = scmp.eq.s32.totalorder %s24, 1
      %p257 = por %p255, %p256
      %p259 = scmp.ne.s32.totalorder %s242, %s258
      %p260 = scmp.eq.s32.totalorder %s24, 0
      %p261 = por %p259, %p260
      %p262 = scmp.le.s32.totalorder 1, %s18
      %p263 = scmp.lt.s32.totalorder %s18, 3
      %p264 = pnand %p262, %p263
      %p265 = pneg %p264
      // Predicated region
      $region9: #{tpu_custom_call.1} parent=5 // pred_check
        _
      $region10: #{tpu_custom_call.1} parent=5 // pred_check_branch
        %267 = sbr.rel (%p264) target = $region12
      $region11: #{tpu_custom_call.1} parent=5 // pred_region
        %s268 = ssub.s32 %s18, 1
        // Predicated region
        $region13: #{tpu_custom_call.1} parent=11 // pred_check
          %p269 = pneg %p79
        $region14: #{tpu_custom_call.1} parent=11 // pred_check_branch
          %271 = sbr.rel (%p269) target = $region16
        $region15: #{tpu_custom_call.1} parent=11 // pred_region
          _
        $region16: #{tpu_custom_call.1} parent=11 // pred_fallthru
          _
        // Predicated region
        $region17: #{tpu_custom_call.1} parent=11 // pred_check
          %p272 = pneg %p100
        $region18: #{tpu_custom_call.1} parent=11 // pred_check_branch
          %274 = sbr.rel (%p272) target = $region20
        $region19: #{tpu_custom_call.1} parent=11 // pred_region
          _
        $region20: #{tpu_custom_call.1} parent=11 // pred_fallthru
          _
        // Predicated region
        $region21: #{tpu_custom_call.1} parent=11 // pred_check
          %p275 = pneg %p121
        $region22: #{tpu_custom_call.1} parent=11 // pred_check_branch
          %277 = sbr.rel (%p275) target = $region24
        $region23: #{tpu_custom_call.1} parent=11 // pred_region
          _
        $region24: #{tpu_custom_call.1} parent=11 // pred_fallthru
          _
        // Predicated region
        $region25: #{tpu_custom_call.1} parent=11 // pred_check
          %p278 = pneg %p142
        $region26: #{tpu_custom_call.1} parent=11 // pred_check_branch
          %280 = sbr.rel (%p278) target = $region28
        $region27: #{tpu_custom_call.1} parent=11 // pred_region
          _
        $region28: #{tpu_custom_call.1} parent=11 // pred_fallthru
          _
        // Predicated region
        $region29: #{tpu_custom_call.1} parent=11 // pred_check
          %p281 = pneg %p163
        $region30: #{tpu_custom_call.1} parent=11 // pred_check_branch
          %283 = sbr.rel (%p281) target = $region32
        $region31: #{tpu_custom_call.1} parent=11 // pred_region
          _
        $region32: #{tpu_custom_call.1} parent=11 // pred_fallthru
          _
        // Predicated region
        $region33: #{tpu_custom_call.1} parent=11 // pred_check
          %p284 = pneg %p184
        $region34: #{tpu_custom_call.1} parent=11 // pred_check_branch
          %286 = sbr.rel (%p284) target = $region36
        $region35: #{tpu_custom_call.1} parent=11 // pred_region
          _
        $region36: #{tpu_custom_call.1} parent=11 // pred_fallthru
          _
        // Predicated region
        $region37: #{tpu_custom_call.1} parent=11 // pred_check
          %p287 = pneg %p205
        $region38: #{tpu_custom_call.1} parent=11 // pred_check_branch
          %289 = sbr.rel (%p287) target = $region40
        $region39: #{tpu_custom_call.1} parent=11 // pred_region
          _
        $region40: #{tpu_custom_call.1} parent=11 // pred_fallthru
          _
        // Predicated region
        $region41: #{tpu_custom_call.1} parent=11 // pred_check
          %p290 = pneg %p226
        $region42: #{tpu_custom_call.1} parent=11 // pred_check_branch
          %292 = sbr.rel (%p290) target = $region44
        $region43: #{tpu_custom_call.1} parent=11 // pred_region
          _
        $region44: #{tpu_custom_call.1} parent=11 // pred_fallthru
          _
      $region12: #{tpu_custom_call.1} parent=5 // pred_fallthru
        _
      %p293 = scmp.lt.s32.totalorder %s18, 2
      // Predicated region
      $region45: #{tpu_custom_call.1} parent=5 // pred_check
        %p294 = pneg %p293
      $region46: #{tpu_custom_call.1} parent=5 // pred_check_branch
        %296 = sbr.rel (%p294) target = $region48
      $region47: #{tpu_custom_call.1} parent=5 // pred_region
        // Predicated region
        $region49: #{tpu_custom_call.1} parent=47 // pred_check
          %p297 = pneg %p52
        $region50: #{tpu_custom_call.1} parent=47 // pred_check_branch
          %299 = sbr.rel (%p297) target = $region52
        $region51: #{tpu_custom_call.1} parent=47 // pred_region
          %s300 = smul.u32 2, %s26
          %p301 = scmp.lt.s32.totalorder %s25, 1
          %s302 = scalar_select %p301, %s25, 1
          %p303 = scmp.lt.s32.totalorder %s300, 1
          %s304 = scalar_select %p303, %s300, 1
          %s305 = smul.addr %s302, 2
          %s306 = sadd.s32 %s304, %s305
          %s307 = smul.addr %s306, 4
          %s308 = scalar_lea.vmem %s0, %s307
          %s309 = smul.u32 2, %s26
        $region52: #{tpu_custom_call.1} parent=47 // pred_fallthru
          _
      $region48: #{tpu_custom_call.1} parent=5 // pred_fallthru
        _
      %p310 = scmp.le.s32.totalorder 1, %s18
      %p311 = scmp.lt.s32.totalorder %s18, 3
      %p312 = pnand %p310, %p311
      %p313 = pneg %p312
      // Predicated region
      $region53: #{tpu_custom_call.1} parent=5 // pred_check
        _
      $region54: #{tpu_custom_call.1} parent=5 // pred_check_branch
        %315 = sbr.rel (%p312) target = $region56
      $region55: #{tpu_custom_call.1} parent=5 // pred_region
        %s316 = ssub.s32 %s18, 1
        %s317 = smul.u32 2, %s28
        %p318 = scmp.lt.s32.totalorder %s27, 1
        %s319 = scalar_select %p318, %s27, 1
        %p320 = scmp.lt.s32.totalorder %s317, 1
        %s321 = scalar_select %p320, %s317, 1
        %s322 = smul.addr %s319, 2
        %s323 = sadd.s32 %s321, %s322
        %s324 = smul.addr %s323, 4
        %s325 = scalar_lea.vmem %s0, %s324
        %p326 = pneg %p58
        %p327 = pneg %p55
        %p328 = pneg %p79
        %p329 = pneg %p76
        %p330 = pneg %p100
        %p331 = pneg %p97
        %p332 = pneg %p121
        %p333 = pneg %p118
        %p334 = pneg %p142
        %p335 = pneg %p139
        %p336 = pneg %p163
        %p337 = pneg %p160
        %p338 = pneg %p184
        %p339 = pneg %p181
        %p340 = pneg %p205
        %p341 = pneg %p202
        %p342 = pneg %p226
        %p343 = pneg %p223
        %p344 = pneg %p254
        %p345 = pneg %p251
        %s346 = sand.u32 %s241, 1
        %s347 = scalar_lea.sflag [#allocation3], %s346
        %s348 = sand.u32 %s241, 1
        %s349 = smul.addr %s348, 8
        %s350 = scalar_lea.vmem [#allocation2], %s349
        %s351 = smul.u32 2, %s28
        %p352 = scmp.lt.s32.totalorder %s27, 1
        %s353 = scalar_select %p352, %s27, 1
        %p354 = scmp.lt.s32.totalorder %s351, 1
        %s355 = scalar_select %p354, %s351, 1
        %s356 = smul.addr %s353, 2
        %s357 = sadd.s32 %s355, %s356
        %s358 = smul.addr %s357, 4
        %s359 = scalar_lea.vmem %s0, %s358
        %s360 = smul.u32 2, %s28
        %s361 = smul.u32 2, %s28
        %v362 = vld [vmem:[%s359] sm:$0xff]
        %v363 = vld [vmem:[%s1] sm:$0xff]
        %v364 = vld [vmem:[%s1 + $0x8] sm:$0xff]
        %v365 = vld [vmem:[%s1 + $0x10] sm:$0xf]
        %v366 = vld [vmem:[%s2] sm:$0xff]
        %v367 = vld [vmem:[%s2 + $0x8] sm:$0xff]
        %v368 = vld [vmem:[%s2 + $0x10] sm:$0xf]
        %370 = vset.pattern.permute.xlu0 0
        %371 = vperm.xlu0 %370, %v366
        %v372 = vpop.permute.xlu0 %371
        %375 = vset.pattern.permute.xlu0 0
        %376 = vperm.xlu0 %375, %v367
        %v377 = vpop.permute.xlu0 %376
        %380 = vset.pattern.permute.xlu0 0
        %381 = vperm.xlu0 %380, %v368
        %v382 = vpop.permute.xlu0 %381
        %385 = vst [vmem:[#allocation1] ss:$2 sm:$0xff] %v362
        %v386 = vld.sshfl [vmem:[#allocation1] sm:$0xff pattern:$0x75316420]
        %v387 = vld.sshfl [vmem:[#allocation1 + $0x8] sm:$0xff pattern:$0x75316420]
        %vm388 = vcmask 31744
        %v390 = vsel %vm388, %v363, 0
        %v393 = vsel %vm388, %v364, 0
        %v396 = vsel %vm388, %v365, 0
        %vm398 = vcmask 1043456
        %v399 = vsel %vm398, %v386, 0
        %v401 = vsel %vm398, %v387, 0
        %403 = vmatpush.msra.mxu0 0.0
        %404 = vmatpush.msra.mxu0 0.0
        %405 = vmatpush.msra.mxu0 0.0
        %406 = vmatpush.msra.mxu0 0.0
        %407 = vmatpush.msra.mxu0 0.0
        %408 = vmatpush.msra.mxu0 0.0
        %409 = vmatpush.msra.mxu0 0.0
        %410 = vmatpush.msra.mxu0 0.0
        %411 = vmatpush.msra.mxu0 0.0
        %412 = vmatpush.msra.mxu0 0.0
        %413 = vmatpush.msra.mxu0 0.0
        %414 = vmatpush.msra.mxu0 0.0
        %415 = vmatpush.msra.mxu0 0.0
        %416 = vmatpush.msra.mxu0 0.0
        %417 = vmatpush.msra.mxu0 0.0
        %418 = vmatpush.msra.mxu0 %v399
        %419 = vmatmul.f32.gmra.mxu0 %v390
        %v420 = vpop.f32.mrf.mxu0
        %v421 = vadd.f32 %v372, %v420
        %422 = vmatmul.f32.gmra.mxu0 %v393
        %v423 = vpop.f32.mrf.mxu0
        %v424 = vadd.f32 %v377, %v423
        %425 = vmatmul.f32.gmra.mxu0 %v396
        %v426 = vpop.f32.mrf.mxu0
        %v427 = vadd.f32 %v382, %v426
        %428 = vdwg.mxu0
        %429 = vmatpush.msra.mxu0 0.0
        %430 = vmatpush.msra.mxu0 0.0
        %431 = vmatpush.msra.mxu0 0.0
        %432 = vmatpush.msra.mxu0 0.0
        %433 = vmatpush.msra.mxu0 0.0
        %434 = vmatpush.msra.mxu0 0.0
        %435 = vmatpush.msra.mxu0 0.0
        %436 = vmatpush.msra.mxu0 0.0
        %437 = vmatpush.msra.mxu0 0.0
        %438 = vmatpush.msra.mxu0 0.0
        %439 = vmatpush.msra.mxu0 0.0
        %440 = vmatpush.msra.mxu0 0.0
        %441 = vmatpush.msra.mxu0 0.0
        %442 = vmatpush.msra.mxu0 0.0
        %443 = vmatpush.msra.mxu0 0.0
        %444 = vmatpush.msra.mxu0 %v401
        %445 = vmatmul.f32.gmra.mxu0 %v390
        %v446 = vpop.f32.mrf.mxu0
        %v447 = vadd.f32 %v372, %v446
        %448 = vmatmul.f32.gmra.mxu0 %v393
        %v449 = vpop.f32.mrf.mxu0
        %v450 = vadd.f32 %v377, %v449
        %451 = vmatmul.f32.gmra.mxu0 %v396
        %v452 = vpop.f32.mrf.mxu0
        %v453 = vadd.f32 %v382, %v452
        %454 = vdwg.mxu0
        %v455 = vmax.f32 %v421, 0.0
        %v456 = vmax.f32 %v447, 0.0
        %v457 = vmax.f32 %v424, 0.0
        %v458 = vmax.f32 %v450, 0.0
        %v459 = vmax.f32 %v427, 0.0
        %v460 = vmax.f32 %v453, 0.0
        %v461 = vld [vmem:[%s3] sm:$0xff]
        %v462 = vld [vmem:[%s3 + $0x8] sm:$0xff]
        %v463 = vld [vmem:[%s3 + $0x10] sm:$0xf]
        %v464 = vld [vmem:[%s4] sm:$0xff]
        %v465 = vld [vmem:[%s4 + $0x8] sm:$0xff]
        %v466 = vld [vmem:[%s4 + $0x10] sm:$0xf]
        %468 = vset.pattern.permute.xlu0 0
        %469 = vperm.xlu0 %468, %v464
        %v470 = vpop.permute.xlu0 %469
        %473 = vset.pattern.permute.xlu0 0
        %474 = vperm.xlu0 %473, %v465
        %v475 = vpop.permute.xlu0 %474
        %478 = vset.pattern.permute.xlu0 0
        %479 = vperm.xlu0 %478, %v466
        %v480 = vpop.permute.xlu0 %479
        %vm482 = vcmask 162816
        %v484 = vsel %vm482, %v461, 0
        %v487 = vsel %vm482, %v462, 0
        %v490 = vsel %vm482, %v463, 0
        %v493 = vsel %vm398, %v459, 0
        %v496 = vsel %vm398, %v460, 0
        %498 = vmatpush.msra.mxu0 0.0
        %499 = vmatpush.msra.mxu0 0.0
        %500 = vmatpush.msra.mxu0 0.0
        %501 = vmatpush.msra.mxu0 0.0
        %502 = vmatpush.msra.mxu0 0.0
        %503 = vmatpush.msra.mxu0 0.0
        %504 = vmatpush.msra.mxu0 0.0
        %505 = vmatpush.msra.mxu0 0.0
        %506 = vmatpush.msra.mxu0 0.0
        %507 = vmatpush.msra.mxu0 0.0
        %508 = vmatpush.msra.mxu0 0.0
        %509 = vmatpush.msra.mxu0 0.0
        %510 = vmatpush.msra.mxu0 0.0
        %511 = vmatpush.msra.mxu0 %v493
        %512 = vmatpush.msra.mxu0 %v457
        %513 = vmatpush.msra.mxu0 %v455
        %514 = vmatmul.f32.gmra.mxu0 %v484
        %v515 = vpop.f32.mrf.mxu0
        %v516 = vadd.f32 %v470, %v515
        %517 = vmatmul.f32.gmra.mxu0 %v487
        %v518 = vpop.f32.mrf.mxu0
        %v519 = vadd.f32 %v475, %v518
        %520 = vmatmul.f32.gmra.mxu0 %v490
        %v521 = vpop.f32.mrf.mxu0
        %v522 = vadd.f32 %v480, %v521
        %523 = vdwg.mxu0
        %524 = vmatpush.msra.mxu0 0.0
        %525 = vmatpush.msra.mxu0 0.0
        %526 = vmatpush.msra.mxu0 0.0
        %527 = vmatpush.msra.mxu0 0.0
        %528 = vmatpush.msra.mxu0 0.0
        %529 = vmatpush.msra.mxu0 0.0
        %530 = vmatpush.msra.mxu0 0.0
        %531 = vmatpush.msra.mxu0 0.0
        %532 = vmatpush.msra.mxu0 0.0
        %533 = vmatpush.msra.mxu0 0.0
        %534 = vmatpush.msra.mxu0 0.0
        %535 = vmatpush.msra.mxu0 0.0
        %536 = vmatpush.msra.mxu0 0.0
        %537 = vmatpush.msra.mxu0 %v496
        %538 = vmatpush.msra.mxu0 %v458
        %539 = vmatpush.msra.mxu0 %v456
        %540 = vmatmul.f32.gmra.mxu0 %v484
        %v541 = vpop.f32.mrf.mxu0
        %v542 = vadd.f32 %v470, %v541
        %543 = vmatmul.f32.gmra.mxu0 %v487
        %v544 = vpop.f32.mrf.mxu0
        %v545 = vadd.f32 %v475, %v544
        %546 = vmatmul.f32.gmra.mxu0 %v490
        %v547 = vpop.f32.mrf.mxu0
        %v548 = vadd.f32 %v480, %v547
        %549 = vdwg.mxu0
        %v550 = vmax.f32 %v516, 0.0
        %v551 = vmax.f32 %v542, 0.0
        %v552 = vmax.f32 %v519, 0.0
        %v553 = vmax.f32 %v545, 0.0
        %v554 = vmax.f32 %v522, 0.0
        %v555 = vmax.f32 %v548, 0.0
        %v556 = vld [vmem:[%s5] sm:$0xff]
        %v557 = vld [vmem:[%s5 + $0x8] sm:$0xff]
        %v558 = vld [vmem:[%s5 + $0x10] sm:$0xf]
        %v559 = vld [vmem:[%s6] sm:$0xff]
        %v560 = vld [vmem:[%s6 + $0x8] sm:$0xff]
        %v561 = vld [vmem:[%s6 + $0x10] sm:$0xf]
        %563 = vset.pattern.permute.xlu0 0
        %564 = vperm.xlu0 %563, %v559
        %v565 = vpop.permute.xlu0 %564
        %568 = vset.pattern.permute.xlu0 0
        %569 = vperm.xlu0 %568, %v560
        %v570 = vpop.permute.xlu0 %569
        %573 = vset.pattern.permute.xlu0 0
        %574 = vperm.xlu0 %573, %v561
        %v575 = vpop.permute.xlu0 %574
        %v578 = vsel %vm482, %v556, 0
        %v581 = vsel %vm482, %v557, 0
        %v584 = vsel %vm482, %v558, 0
        %v587 = vsel %vm398, %v554, 0
        %v590 = vsel %vm398, %v555, 0
        %592 = vmatpush.msra.mxu0 0.0
        %593 = vmatpush.msra.mxu0 0.0
        %594 = vmatpush.msra.mxu0 0.0
        %595 = vmatpush.msra.mxu0 0.0
        %596 = vmatpush.msra.mxu0 0.0
        %597 = vmatpush.msra.mxu0 0.0
        %598 = vmatpush.msra.mxu0 0.0
        %599 = vmatpush.msra.mxu0 0.0
        %600 = vmatpush.msra.mxu0 0.0
        %601 = vmatpush.msra.mxu0 0.0
        %602 = vmatpush.msra.mxu0 0.0
        %603 = vmatpush.msra.mxu0 0.0
        %604 = vmatpush.msra.mxu0 0.0
        %605 = vmatpush.msra.mxu0 %v587
        %606 = vmatpush.msra.mxu0 %v552
        %607 = vmatpush.msra.mxu0 %v550
        %608 = vmatmul.f32.gmra.mxu0 %v578
        %v609 = vpop.f32.mrf.mxu0
        %v610 = vadd.f32 %v565, %v609
        %611 = vmatmul.f32.gmra.mxu0 %v581
        %v612 = vpop.f32.mrf.mxu0
        %v613 = vadd.f32 %v570, %v612
        %614 = vmatmul.f32.gmra.mxu0 %v584
        %v615 = vpop.f32.mrf.mxu0
        %v616 = vadd.f32 %v575, %v615
        %617 = vdwg.mxu0
        %618 = vmatpush.msra.mxu0 0.0
        %619 = vmatpush.msra.mxu0 0.0
        %620 = vmatpush.msra.mxu0 0.0
        %621 = vmatpush.msra.mxu0 0.0
        %622 = vmatpush.msra.mxu0 0.0
        %623 = vmatpush.msra.mxu0 0.0
        %624 = vmatpush.msra.mxu0 0.0
        %625 = vmatpush.msra.mxu0 0.0
        %626 = vmatpush.msra.mxu0 0.0
        %627 = vmatpush.msra.mxu0 0.0
        %628 = vmatpush.msra.mxu0 0.0
        %629 = vmatpush.msra.mxu0 0.0
        %630 = vmatpush.msra.mxu0 0.0
        %631 = vmatpush.msra.mxu0 %v590
        %632 = vmatpush.msra.mxu0 %v553
        %633 = vmatpush.msra.mxu0 %v551
        %634 = vmatmul.f32.gmra.mxu0 %v578
        %v635 = vpop.f32.mrf.mxu0
        %v636 = vadd.f32 %v565, %v635
        %637 = vmatmul.f32.gmra.mxu0 %v581
        %v638 = vpop.f32.mrf.mxu0
        %v639 = vadd.f32 %v570, %v638
        %640 = vmatmul.f32.gmra.mxu0 %v584
        %v641 = vpop.f32.mrf.mxu0
        %v642 = vadd.f32 %v575, %v641
        %643 = vdwg.mxu0
        %v644 = vmax.f32 %v610, 0.0
        %v645 = vmax.f32 %v636, 0.0
        %v646 = vmax.f32 %v613, 0.0
        %v647 = vmax.f32 %v639, 0.0
        %v648 = vmax.f32 %v616, 0.0
        %v649 = vmax.f32 %v642, 0.0
        %v650 = vld [vmem:[%s7] sm:$0xf]
        %v651 = vld [vmem:[%s8] sm:$0xf]
        %653 = vset.pattern.permute.xlu0 0
        %654 = vperm.xlu0 %653, %v651
        %v655 = vpop.permute.xlu0 %654
        %v658 = vsel %vm482, %v650, 0
        %v661 = vsel %vm398, %v648, 0
        %v664 = vsel %vm398, %v649, 0
        %666 = vmatpush.msra.mxu0 0.0
        %667 = vmatpush.msra.mxu0 0.0
        %668 = vmatpush.msra.mxu0 0.0
        %669 = vmatpush.msra.mxu0 0.0
        %670 = vmatpush.msra.mxu0 0.0
        %671 = vmatpush.msra.mxu0 0.0
        %672 = vmatpush.msra.mxu0 0.0
        %673 = vmatpush.msra.mxu0 0.0
        %674 = vmatpush.msra.mxu0 0.0
        %675 = vmatpush.msra.mxu0 0.0
        %676 = vmatpush.msra.mxu0 0.0
        %677 = vmatpush.msra.mxu0 0.0
        %678 = vmatpush.msra.mxu0 0.0
        %679 = vmatpush.msra.mxu0 %v661
        %680 = vmatpush.msra.mxu0 %v646
        %681 = vmatpush.msra.mxu0 %v644
        %682 = vmatmul.f32.gmra.mxu0 %v658
        %v683 = vpop.f32.mrf.mxu0
        %v684 = vadd.f32 %v655, %v683
        %685 = vdwg.mxu0
        %686 = vmatpush.msra.mxu0 0.0
        %687 = vmatpush.msra.mxu0 0.0
        %688 = vmatpush.msra.mxu0 0.0
        %689 = vmatpush.msra.mxu0 0.0
        %690 = vmatpush.msra.mxu0 0.0
        %691 = vmatpush.msra.mxu0 0.0
        %692 = vmatpush.msra.mxu0 0.0
        %693 = vmatpush.msra.mxu0 0.0
        %694 = vmatpush.msra.mxu0 0.0
        %695 = vmatpush.msra.mxu0 0.0
        %696 = vmatpush.msra.mxu0 0.0
        %697 = vmatpush.msra.mxu0 0.0
        %698 = vmatpush.msra.mxu0 0.0
        %699 = vmatpush.msra.mxu0 %v664
        %700 = vmatpush.msra.mxu0 %v647
        %701 = vmatpush.msra.mxu0 %v645
        %702 = vmatmul.f32.gmra.mxu0 %v658
        %v703 = vpop.f32.mrf.mxu0
        %v704 = vadd.f32 %v655, %v703
        %705 = vdwg.mxu0
        %706 = vst [vmem:[#allocation1] ss:$2 sm:$0xff] %v362
        %v707 = vld.sshfl [vmem:[#allocation1] sm:$0xff pattern:$0x75316420]
        %v708 = vld.sshfl [vmem:[#allocation1 + $0x8] sm:$0xff pattern:$0x75316420]
        %v711 = vadd.f32 %v684, %v707
        %v712 = vadd.f32 %v704, %v708
        %v715 = vrot.slane %v712, 4
        %v716 = vsel %vm398, %v711, %v715
        %718 = vst [vmem:[%s350] sm:$0xff] %v716
        %s719 = sand.u32 %s241, 1
        %s720 = scalar_lea.sflag [#allocation3], %s719
        %s721 = sand.u32 %s241, 1
        %s722 = smul.addr %s721, 8
        %s723 = scalar_lea.vmem [#allocation2], %s722
        // Predicated region
        $region57: #{tpu_custom_call.1} parent=55 // pred_check
          %p724 = pneg %p251
        $region58: #{tpu_custom_call.1} parent=55 // pred_check_branch
          %726 = sbr.rel (%p724) target = $region60
        $region59: #{tpu_custom_call.1} parent=55 // pred_region
          %s727 = smul.u32 2, %s28
          %729 = vsyncadd %s720, 0
          %s730 = smul.addr %s27, 2
          %s731 = sadd.s32 %s727, %s730
          %s732 = smul.addr %s731, 4
          %s733 = scalar_lea.hbm %s9, %s732
          %s735 = sshll.u32 %s723, 4
          %s736 = int_to_ptr.vmem [resolvable:$true] %s735
          %s737 = sshll.u32 %s733, 4
          %s738 = int_to_ptr.hbm [resolvable:$true] %s737
          %740 = dma.vmem_to_hbm [thread:$0]  %s736, 128, %s738, %s720
        $region60: #{tpu_custom_call.1} parent=55 // pred_fallthru
          _
      $region56: #{tpu_custom_call.1} parent=5 // pred_fallthru
        _
      %p741 = scmp.le.s32.totalorder 2, %s18
      // Predicated region
      $region61: #{tpu_custom_call.1} parent=5 // pred_check
        %p742 = pneg %p741
      $region62: #{tpu_custom_call.1} parent=5 // pred_check_branch
        %744 = sbr.rel (%p742) target = $region64
      $region63: #{tpu_custom_call.1} parent=5 // pred_region
        %s745 = ssub.s32 %s18, 2
        // Predicated region
        $region65: #{tpu_custom_call.1} parent=63 // pred_check
          %p746 = pneg %p257
        $region66: #{tpu_custom_call.1} parent=63 // pred_check_branch
          %748 = sbr.rel (%p746) target = $region68
        $region67: #{tpu_custom_call.1} parent=63 // pred_region
          %s749 = sand.u32 %s242, 1
          %s750 = scalar_lea.sflag [#allocation3], %s749
          %s751 = sand.u32 %s242, 1
          %s752 = smul.addr %s751, 8
          %s753 = scalar_lea.vmem [#allocation2], %s752
          %755 = dma.done %s750, 128
        $region68: #{tpu_custom_call.1} parent=63 // pred_fallthru
          _
      $region64: #{tpu_custom_call.1} parent=5 // pred_fallthru
        _
    $region6: #{tpu_custom_call.1} parent=1 // loop_footer
      %s22 = sadd.s32 1, %s18
    $region7: #{tpu_custom_call.1} parent=1 // loop_footer_branch
      %17 = sbr.rel target = $region3
    $region8: #{tpu_custom_call.1} parent=1 // loop_exit
      _
    %756 = vsyncpa [#allocation3], 1
    %s757 = scalar_lea.sflag [#allocation3], 1
    %758 = vsyncpa %s757, 1

</llo_original>
